<compile_context>
chip_gen: v7x
topology: tpu7x:2x2x1
jax: 0.10.0
libtpu: 0.0.40
codegen_flags: <defaults>
</compile_context>

<pallas_src>
import functools

import jax
import jax.numpy as jnp
from jax import lax
from jax.experimental import pallas as pl
from jax.experimental.pallas import tpu as pltpu

_VMEM_LIMIT = 32 * 1024 * 1024  # explicit, safe on v5e/v6e/v7x


def _row_tile(rows, cap=256):
    """Largest multiple-of-8 divisor of `rows` that is <= cap (else full)."""
    t = min(cap, rows)
    t -= t % 8
    while t >= 8:
        if rows % t == 0:
            return t
        t -= 8
    return rows


def _compiler_params():
    return pltpu.CompilerParams(
        dimension_semantics=("parallel",),
        vmem_limit_bytes=_VMEM_LIMIT,
    )


# ----------------------------------------------------------------------------
# Fused 1x1 conv (channel matmul) + folded BN (+ residual) (+ ReLU)
# ----------------------------------------------------------------------------
def _pw_conv_bn_kernel(x_ref, w_ref, scale_ref, shift_ref, *rest,
                       relu, has_residual):
    if has_residual:
        res_ref, o_ref = rest
    else:
        (o_ref,) = rest
    y = jnp.dot(x_ref[...], w_ref[...], preferred_element_type=jnp.float32)
    y = y * scale_ref[...] + shift_ref[...]
    if has_residual:
        y = y + res_ref[...].astype(jnp.float32)
    if relu:
        y = jnp.maximum(y, 0.0)
    o_ref[...] = y.astype(o_ref.dtype)


def _pointwise_conv_bn(x2d, w, scale, shift, residual=None, *, relu):
    rows, cin = x2d.shape
    cout = w.shape[1]
    tile = _row_tile(rows)
    grid = (rows // tile,)

    in_specs = [
        pl.BlockSpec((tile, cin), lambda i: (i, 0)),     # streamed activation
        pl.BlockSpec((cin, cout), lambda i: (0, 0)),     # resident weight
        pl.BlockSpec((1, cout), lambda i: (0, 0)),       # resident BN scale
        pl.BlockSpec((1, cout), lambda i: (0, 0)),       # resident BN shift
    ]
    args = [x2d, w, scale, shift]
    if residual is not None:
        in_specs.append(pl.BlockSpec((tile, cout), lambda i: (i, 0)))
        args.append(residual)

    kernel = functools.partial(_pw_conv_bn_kernel, relu=relu,
                               has_residual=residual is not None)
    return pl.pallas_call(
        kernel,
        out_shape=jax.ShapeDtypeStruct((rows, cout), x2d.dtype),
        grid=grid,
        in_specs=in_specs,
        out_specs=pl.BlockSpec((tile, cout), lambda i: (i, 0)),
        compiler_params=_compiler_params(),
    )(*args)


# ----------------------------------------------------------------------------
# 3x3 conv (padding=1, stride=1) + folded BN + ReLU; 9 shifted MXU matmuls
# ----------------------------------------------------------------------------
def _conv3x3_bn_relu_kernel(xp_ref, w_ref, scale_ref, shift_ref, o_ref, *, H, W):
    xp = xp_ref[0]                       # (H+2, W+2, C) in input dtype
    c_in = xp.shape[-1]
    c_out = o_ref.shape[-1]
    acc = jnp.zeros((H * W, c_out), jnp.float32)
    for t in range(9):                   # static unroll: 9 taps
        dy, dx = divmod(t, 3)
        win = xp[dy:dy + H, dx:dx + W, :]            # (H, W, C)
        win2d = win.reshape(H * W, c_in)
        acc = acc + jnp.dot(win2d, w_ref[t],
                            preferred_element_type=jnp.float32)
    y = acc * scale_ref[...] + shift_ref[...]
    y = jnp.maximum(y, 0.0)
    o_ref[...] = y.reshape(1, H, W, c_out).astype(o_ref.dtype)


def _conv3x3_bn_relu(x_nhwc, w_hwio, scale, shift):
    B, H, W, C = x_nhwc.shape
    c_out = w_hwio.shape[-1]
    xp = jnp.pad(x_nhwc, ((0, 0), (1, 1), (1, 1), (0, 0)))
    Hp, Wp = H + 2, W + 2
    w9 = w_hwio.reshape(9, C, c_out)     # tap-major: w9[dy*3+dx]

    return pl.pallas_call(
        functools.partial(_conv3x3_bn_relu_kernel, H=H, W=W),
        out_shape=jax.ShapeDtypeStruct((B, H, W, c_out), x_nhwc.dtype),
        grid=(B,),
        in_specs=[
            pl.BlockSpec((1, Hp, Wp, C), lambda b: (b, 0, 0, 0)),
            pl.BlockSpec((9, C, c_out), lambda b: (0, 0, 0)),
            pl.BlockSpec((1, c_out), lambda b: (0, 0)),
            pl.BlockSpec((1, c_out), lambda b: (0, 0)),
        ],
        out_specs=pl.BlockSpec((1, H, W, c_out), lambda b: (b, 0, 0, 0)),
        compiler_params=_compiler_params(),
    )(xp, w9, scale, shift)


# ----------------------------------------------------------------------------
# Full Bottleneck forward
# ----------------------------------------------------------------------------
def bottleneck_forward(x_nchw, params, *, stride=1):
    B, c_in, H, W = x_nchw.shape
    planes = params["w1"].shape[1]
    c_out = params["w3"].shape[1]        # planes * expansion

    x_nhwc = jnp.transpose(x_nchw, (0, 2, 3, 1))       # (B, H, W, Cin)
    x2d = x_nhwc.reshape(B * H * W, c_in)

    # conv1 (1x1) + BN1 + ReLU
    h1 = _pointwise_conv_bn(x2d, params["w1"], params["scale1"],
                            params["shift1"], relu=True)
    h1 = h1.reshape(B, H, W, planes)

    # conv2 (3x3, padding=1) + BN2 + ReLU
    h2 = _conv3x3_bn_relu(h1, params["w2"], params["scale2"], params["shift2"])
    if stride > 1:
        # TODO(synk): dedicated strided-output 3x3 kernel; subsampling the
        # stride-1 result is mathematically identical (extra compute only).
        h2 = h2[:, ::stride, ::stride, :]
    Ho, Wo = h2.shape[1], h2.shape[2]
    h2_2d = h2.reshape(B * Ho * Wo, planes)

    # Identity residual (downsample=None) requires matching shapes, exactly
    # like the PyTorch module.
    assert stride == 1 and c_in == c_out, \
        "identity residual requires stride=1 and inplanes == planes*expansion"
    res2d = x2d

    # conv3 (1x1) + BN3 + residual add + final ReLU, fused in one kernel.
    out2d = _pointwise_conv_bn(h2_2d, params["w3"], params["scale3"],
                               params["shift3"], residual=res2d, relu=True)
    out = out2d.reshape(B, Ho, Wo, c_out)
    return jnp.transpose(out, (0, 3, 1, 2))            # back to NCHW


# ----------------------------------------------------------------------------
# Parameter init (conv weights + inference-mode BN folded to scale/shift)
# ----------------------------------------------------------------------------
def init_bottleneck_params(key, inplanes, planes, expansion=4, eps=1e-5,
                           dtype=jnp.float32):
    c_out = planes * expansion
    ks = jax.random.split(key, 15)

    w1 = jax.random.normal(ks[0], (inplanes, planes), dtype) * (2.0 / inplanes) ** 0.5
    w2 = jax.random.normal(ks[1], (3, 3, planes, planes), dtype) * (2.0 / (9 * planes)) ** 0.5
    w3 = jax.random.normal(ks[2], (planes, c_out), dtype) * (2.0 / planes) ** 0.5

    def folded_bn(k0, k1, k2, k3, c):
        gamma = 1.0 + 0.1 * jax.random.normal(k0, (c,), dtype)
        beta = 0.1 * jax.random.normal(k1, (c,), dtype)
        mean = 0.1 * jax.random.normal(k2, (c,), dtype)
        var = jax.random.uniform(k3, (c,), dtype, 0.5, 1.5)
        scale = gamma / jnp.sqrt(var + eps)
        shift = beta - mean * scale
        return scale.reshape(1, c), shift.reshape(1, c)

    scale1, shift1 = folded_bn(ks[3], ks[4], ks[5], ks[6], planes)
    scale2, shift2 = folded_bn(ks[7], ks[8], ks[9], ks[10], planes)
    scale3, shift3 = folded_bn(ks[11], ks[12], ks[13], ks[14], c_out)

    return dict(w1=w1, w2=w2, w3=w3,
                scale1=scale1, shift1=shift1,
                scale2=scale2, shift2=shift2,
                scale3=scale3, shift3=shift3)


# ----------------------------------------------------------------------------
# Pure-JAX reference
# ----------------------------------------------------------------------------
def bottleneck_ref(x_nchw, params, *, stride=1):
    dn = ("NHWC", "HWIO", "NHWC")
    hp = lax.Precision.HIGHEST
    x = jnp.transpose(x_nchw, (0, 2, 3, 1)).astype(jnp.float32)

    def bn(y, s, sh):
        return y * s.reshape(-1) + sh.reshape(-1)

    h = lax.conv_general_dilated(x, params["w1"][None, None].astype(jnp.float32),
                                 (1, 1), "VALID", dimension_numbers=dn, precision=hp)
    h = jnp.maximum(bn(h, params["scale1"], params["shift1"]), 0.0)
    h = lax.conv_general_dilated(h, params["w2"].astype(jnp.float32),
                                 (stride, stride), ((1, 1), (1, 1)),
                                 dimension_numbers=dn, precision=hp)
    h = jnp.maximum(bn(h, params["scale2"], params["shift2"]), 0.0)
    h = lax.conv_general_dilated(h, params["w3"][None, None].astype(jnp.float32),
                                 (1, 1), "VALID", dimension_numbers=dn, precision=hp)
    h = bn(h, params["scale3"], params["shift3"])
    h = h + x
    h = jnp.maximum(h, 0.0)
    return jnp.transpose(h, (0, 3, 1, 2)).astype(x_nchw.dtype)


if __name__ == "__main__":
    # Bottleneck(inplanes=16, planes=4, stride=1, downsample=None): identity
    # residual works because inplanes == planes * expansion.
    B, H, W = 2, 16, 16
    planes, expansion = 4, 4
    inplanes = planes * expansion

    key = jax.random.PRNGKey(0)
    kx, kp = jax.random.split(key)
    x = jax.random.normal(kx, (B, inplanes, H, W), jnp.float32)
    params = init_bottleneck_params(kp, inplanes, planes, expansion)

    out = bottleneck_forward(x, params, stride=1)
    jax.block_until_ready(out)

    ref = bottleneck_ref(x, params, stride=1)
    assert out.shape == (B, planes * expansion, H, W)
    assert jnp.allclose(out, ref, atol=2e-4, rtol=2e-4), \
        float(jnp.max(jnp.abs(out - ref)))

    print("KERNEL_OK")
</pallas_src>

<mosaic_0001>
module attributes {stable_mosaic.version = 11 : i64} {
  func.func @_pw_conv_bn_kernel(%arg0: i32, %arg1: memref<256x16xf32, #tpu.memory_space<vmem>>, %arg2: memref<16x4xf32, #tpu.memory_space<vmem>>, %arg3: memref<1x4xf32, #tpu.memory_space<vmem>>, %arg4: memref<1x4xf32, #tpu.memory_space<vmem>>, %arg5: memref<256x4xf32, #tpu.memory_space<vmem>>) attributes {dimension_semantics = [#tpu.dimension_semantics<parallel>], iteration_bounds = array<i64: 2>, scalar_prefetch = 0 : i64, scratch_operands = 0 : i64, tpu.core_type = #tpu.core_type<tc>, window_params = [{transform_indices = @transform_0, window_bounds = array<i64: 256, 16>}, {pipeline_mode = #tpu.pipeline_mode<synchronous>, transform_indices = @transform_1, window_bounds = array<i64: 16, 4>}, {pipeline_mode = #tpu.pipeline_mode<synchronous>, transform_indices = @transform_2, window_bounds = array<i64: 1, 4>}, {pipeline_mode = #tpu.pipeline_mode<synchronous>, transform_indices = @transform_3, window_bounds = array<i64: 1, 4>}, {transform_indices = @transform_4, window_bounds = array<i64: 256, 4>}]} {
    %c0 = arith.constant 0 : index
    %c0_0 = arith.constant 0 : index
    %0 = vector.load %arg1[%c0, %c0_0] : memref<256x16xf32, #tpu.memory_space<vmem>>, vector<256x16xf32>
    %c0_1 = arith.constant 0 : index
    %c0_2 = arith.constant 0 : index
    %1 = vector.load %arg2[%c0_1, %c0_2] : memref<16x4xf32, #tpu.memory_space<vmem>>, vector<16x4xf32>
    %cst = arith.constant dense<0.000000e+00> : vector<256x4xf32>
    %2 = tpu.matmul %0, %1, %cst {dimension_numbers = #tpu.dot_dimension_numbers<[1], [0], [0], [1], [0, 0, 1, 1], [], []>} : vector<256x16xf32>, vector<16x4xf32>, vector<256x4xf32> -> vector<256x4xf32>
    %c0_3 = arith.constant 0 : index
    %c0_4 = arith.constant 0 : index
    %3 = vector.load %arg3[%c0_3, %c0_4] : memref<1x4xf32, #tpu.memory_space<vmem>>, vector<1x4xf32>
    %4 = vector.broadcast %3 : vector<1x4xf32> to vector<256x4xf32>
    %5 = arith.mulf %2, %4 : vector<256x4xf32>
    %c0_5 = arith.constant 0 : index
    %c0_6 = arith.constant 0 : index
    %6 = vector.load %arg4[%c0_5, %c0_6] : memref<1x4xf32, #tpu.memory_space<vmem>>, vector<1x4xf32>
    %7 = vector.broadcast %6 : vector<1x4xf32> to vector<256x4xf32>
    %8 = arith.addf %5, %7 : vector<256x4xf32>
    %cst_7 = arith.constant 0.000000e+00 : f32
    %9 = vector.broadcast %cst_7 : f32 to vector<256x4xf32>
    %10 = arith.maximumf %8, %9 : vector<256x4xf32>
    %c0_8 = arith.constant 0 : index
    %c0_9 = arith.constant 0 : index
    %11 = vector.load %arg5[%c0_8, %c0_9] : memref<256x4xf32, #tpu.memory_space<vmem>>, vector<256x4xf32>
    tpu.vector_store %arg5[%c0_8, %c0_9], %10 {strides = array<i32>} : memref<256x4xf32, #tpu.memory_space<vmem>>, vector<256x4xf32>,
    return
  }
  func.func @transform_0(%arg0: i32) -> (i32, i32) {
    %c0_i32 = arith.constant 0 : i32
    %c0_i32_0 = arith.constant 0 : i32
    return %arg0, %c0_i32 : i32, i32
  }
  func.func @transform_1(%arg0: i32) -> (i32, i32) {
    %c0_i32 = arith.constant 0 : i32
    %c0_i32_0 = arith.constant 0 : i32
    %c0_i32_1 = arith.constant 0 : i32
    return %c0_i32, %c0_i32_0 : i32, i32
  }
  func.func @transform_2(%arg0: i32) -> (i32, i32) {
    %c0_i32 = arith.constant 0 : i32
    %c0_i32_0 = arith.constant 0 : i32
    %c0_i32_1 = arith.constant 0 : i32
    return %c0_i32, %c0_i32_0 : i32, i32
  }
  func.func @transform_3(%arg0: i32) -> (i32, i32) {
    %c0_i32 = arith.constant 0 : i32
    %c0_i32_0 = arith.constant 0 : i32
    %c0_i32_1 = arith.constant 0 : i32
    return %c0_i32, %c0_i32_0 : i32, i32
  }
  func.func @transform_4(%arg0: i32) -> (i32, i32) {
    %c0_i32 = arith.constant 0 : i32
    %c0_i32_0 = arith.constant 0 : i32
    return %arg0, %c0_i32 : i32, i32
  }
}

</mosaic_0001>

<llo_original>
// kernel: tpu_custom_call.1
$region0: #{tpu_custom_call.1}
  #allocation0 [shape = 'u32[]', space=smem, size = 0x4, offset = 0x4, fixed_abs, tag = 'smem constant byte address 0x4 - core index']
  #allocation1 [shape = 'u32[144,128]{1,0:T(1,128)}', space=vmem, size = 0x12000, scoped, tag = 'internal scratch']
  %s0 = inlined_call_operand.vmem [shape: f32[512,16], index: 0, kind: input, shape index: {}]
  %s1 = inlined_call_operand.vmem [shape: f32[16,4], index: 1, kind: input, shape index: {}]
  %s2 = inlined_call_operand.vmem [shape: f32[1,4], index: 2, kind: input, shape index: {}]
  %s3 = inlined_call_operand.vmem [shape: f32[1,4], index: 3, kind: input, shape index: {}]
  %s4 = inlined_call_operand.vmem [shape: f32[512,4], index: 4, kind: output, shape index: {}]
  %s5 = sld [smem:[#allocation0]]
  $region49: #{tpu_custom_call.1} parent=0
    _
  %s7 = ssub.s32 1, %s5
  %s8 = scalar_select 0, %s7, %s5
  loop: start=0, step=1, limit=4
  $region2: #{tpu_custom_call.1} parent=0 // loop_pre_header
    _
  $region3: #{tpu_custom_call.1} parent=0 // loop_header
    %s10 = sphi 0, %s14
    %p11 = scmp.ge.s32.totalorder %s10, 4
    %s20 = sphi 0, %s22
    %s23 = sphi 0, %s20
    %s24 = sphi 0, %s23
    %s40 = sphi 0, %s24
    %s44 = sphi 0, %s44
    %s46 = sphi 0, %s44
    %s47 = sphi 0, %s46
    %s61 = sphi 0, %s47
    %s65 = sphi 0, %s65
    %s67 = sphi 0, %s65
    %s68 = sphi 0, %s67
    %s82 = sphi 0, %s68
    %s86 = sphi 0, %s86
    %s88 = sphi 0, %s86
    %s89 = sphi 0, %s88
    %s103 = sphi 0, %s89
    %s109 = sphi 0, %s111
    %s112 = sphi 0, %s109
    %s113 = sphi 0, %s112
    %s129 = sphi 0, %s113
  $region4: #{tpu_custom_call.1} parent=0 // loop_header_branch
    %13 = sbr.rel (%p11) target = $region8
  $region5: #{tpu_custom_call.1} parent=0 // loop_body
    %s15 = ssub.s32 %s10, 1
    %s16 = ssub.s32 %s10, 2
    %s17 = sadd.s32 %s10, 1
    %s18 = ssub.s32 %s10, %s17
    %p19 = scmp.eq.s32.totalorder %s18, 0
    %s21 = sadd.s32 %s20, 1
    %s22 = scalar_select %p19, %s20, %s21
    %p25 = pneg %p19
    %p26 = scmp.eq.s32.totalorder %s10, 1
    %p27 = por %p25, %p26
    %p28 = scmp.ne.s32.totalorder %s20, %s23
    %p29 = scmp.eq.s32.totalorder %s10, 0
    %p30 = por %p28, %p29
    %p31 = scmp.ne.s32.totalorder %s20, %s23
    %p32 = scmp.eq.s32.totalorder %s15, 1
    %p33 = por %p31, %p32
    %p34 = scmp.ne.s32.totalorder %s23, %s24
    %p35 = scmp.eq.s32.totalorder %s15, 0
    %p36 = por %p34, %p35
    %p37 = scmp.ne.s32.totalorder %s23, %s24
    %p38 = scmp.eq.s32.totalorder %s16, 1
    %p39 = por %p37, %p38
    %p41 = scmp.ne.s32.totalorder %s24, %s40
    %p42 = scmp.eq.s32.totalorder %s16, 0
    %p43 = por %p41, %p42
    %s45 = sadd.s32 %s44, 1
    %p48 = scmp.eq.s32.totalorder %s10, 1
    %p49 = scmp.ne.s32.totalorder %s44, %s46
    %p50 = scmp.eq.s32.totalorder %s10, 0
    %p51 = por %p49, %p50
    %p52 = scmp.ne.s32.totalorder %s44, %s46
    %p53 = scmp.eq.s32.totalorder %s15, 1
    %p54 = por %p52, %p53
    %p55 = scmp.ne.s32.totalorder %s46, %s47
    %p56 = scmp.eq.s32.totalorder %s15, 0
    %p57 = por %p55, %p56
    %p58 = scmp.ne.s32.totalorder %s46, %s47
    %p59 = scmp.eq.s32.totalorder %s16, 1
    %p60 = por %p58, %p59
    %p62 = scmp.ne.s32.totalorder %s47, %s61
    %p63 = scmp.eq.s32.totalorder %s16, 0
    %p64 = por %p62, %p63
    %s66 = sadd.s32 %s65, 1
    %p69 = scmp.eq.s32.totalorder %s10, 1
    %p70 = scmp.ne.s32.totalorder %s65, %s67
    %p71 = scmp.eq.s32.totalorder %s10, 0
    %p72 = por %p70, %p71
    %p73 = scmp.ne.s32.totalorder %s65, %s67
    %p74 = scmp.eq.s32.totalorder %s15, 1
    %p75 = por %p73, %p74
    %p76 = scmp.ne.s32.totalorder %s67, %s68
    %p77 = scmp.eq.s32.totalorder %s15, 0
    %p78 = por %p76, %p77
    %p79 = scmp.ne.s32.totalorder %s67, %s68
    %p80 = scmp.eq.s32.totalorder %s16, 1
    %p81 = por %p79, %p80
    %p83 = scmp.ne.s32.totalorder %s68, %s82
    %p84 = scmp.eq.s32.totalorder %s16, 0
    %p85 = por %p83, %p84
    %s87 = sadd.s32 %s86, 1
    %p90 = scmp.eq.s32.totalorder %s10, 1
    %p91 = scmp.ne.s32.totalorder %s86, %s88
    %p92 = scmp.eq.s32.totalorder %s10, 0
    %p93 = por %p91, %p92
    %p94 = scmp.ne.s32.totalorder %s86, %s88
    %p95 = scmp.eq.s32.totalorder %s15, 1
    %p96 = por %p94, %p95
    %p97 = scmp.ne.s32.totalorder %s88, %s89
    %p98 = scmp.eq.s32.totalorder %s15, 0
    %p99 = por %p97, %p98
    %p100 = scmp.ne.s32.totalorder %s88, %s89
    %p101 = scmp.eq.s32.totalorder %s16, 1
    %p102 = por %p100, %p101
    %p104 = scmp.ne.s32.totalorder %s89, %s103
    %p105 = scmp.eq.s32.totalorder %s16, 0
    %p106 = por %p104, %p105
    %s107 = ssub.s32 %s10, %s17
    %p108 = scmp.eq.s32.totalorder %s107, 0
    %s110 = sadd.s32 %s109, 1
    %s111 = scalar_select %p108, %s109, %s110
    %p114 = pneg %p108
    %p115 = scmp.eq.s32.totalorder %s10, 1
    %p116 = por %p114, %p115
    %p117 = scmp.ne.s32.totalorder %s109, %s112
    %p118 = scmp.eq.s32.totalorder %s10, 0
    %p119 = por %p117, %p118
    %p120 = scmp.ne.s32.totalorder %s109, %s112
    %p121 = scmp.eq.s32.totalorder %s15, 1
    %p122 = por %p120, %p121
    %p123 = scmp.ne.s32.totalorder %s112, %s113
    %p124 = scmp.eq.s32.totalorder %s15, 0
    %p125 = por %p123, %p124
    %p126 = scmp.ne.s32.totalorder %s112, %s113
    %p127 = scmp.eq.s32.totalorder %s16, 1
    %p128 = por %p126, %p127
    %p130 = scmp.ne.s32.totalorder %s113, %s129
    %p131 = scmp.eq.s32.totalorder %s16, 0
    %p132 = por %p130, %p131
    %p133 = scmp.le.s32.totalorder 1, %s10
    %p134 = scmp.lt.s32.totalorder %s10, 3
    %p135 = pnand %p133, %p134
    %p136 = pneg %p135
    // Predicated region
    $region9: #{tpu_custom_call.1} parent=5 // pred_check
      _
    $region10: #{tpu_custom_call.1} parent=5 // pred_check_branch
      %138 = sbr.rel (%p135) target = $region12
    $region11: #{tpu_custom_call.1} parent=5 // pred_region
      %s139 = ssub.s32 %s10, 1
      // Predicated region
      $region13: #{tpu_custom_call.1} parent=11 // pred_check
        %p140 = pneg %p57
      $region14: #{tpu_custom_call.1} parent=11 // pred_check_branch
        %142 = sbr.rel (%p140) target = $region16
      $region15: #{tpu_custom_call.1} parent=11 // pred_region
        _
      $region16: #{tpu_custom_call.1} parent=11 // pred_fallthru
        _
      // Predicated region
      $region17: #{tpu_custom_call.1} parent=11 // pred_check
        %p143 = pneg %p78
      $region18: #{tpu_custom_call.1} parent=11 // pred_check_branch
        %145 = sbr.rel (%p143) target = $region20
      $region19: #{tpu_custom_call.1} parent=11 // pred_region
        _
      $region20: #{tpu_custom_call.1} parent=11 // pred_fallthru
        _
      // Predicated region
      $region21: #{tpu_custom_call.1} parent=11 // pred_check
        %p146 = pneg %p99
      $region22: #{tpu_custom_call.1} parent=11 // pred_check_branch
        %148 = sbr.rel (%p146) target = $region24
      $region23: #{tpu_custom_call.1} parent=11 // pred_region
        _
      $region24: #{tpu_custom_call.1} parent=11 // pred_fallthru
        _
    $region12: #{tpu_custom_call.1} parent=5 // pred_fallthru
      _
    %p149 = scmp.lt.s32.totalorder %s10, 2
    // Predicated region
    $region25: #{tpu_custom_call.1} parent=5 // pred_check
      %p150 = pneg %p149
    $region26: #{tpu_custom_call.1} parent=5 // pred_check_branch
      %152 = sbr.rel (%p150) target = $region28
    $region27: #{tpu_custom_call.1} parent=5 // pred_region
      // Predicated region
      $region29: #{tpu_custom_call.1} parent=27 // pred_check
        %p153 = pneg %p30
      $region30: #{tpu_custom_call.1} parent=27 // pred_check_branch
        %155 = sbr.rel (%p153) target = $region32
      $region31: #{tpu_custom_call.1} parent=27 // pred_region
        %s156 = smul.u32 32, %s10
        %p157 = scmp.lt.s32.totalorder %s156, 63
        %s158 = scalar_select %p157, %s156, 63
        %s159 = smul.addr %s158, 8
        %s160 = scalar_lea.vmem %s0, %s159
        %s161 = smul.u32 32, %s10
      $region32: #{tpu_custom_call.1} parent=27 // pred_fallthru
        _
    $region28: #{tpu_custom_call.1} parent=5 // pred_fallthru
      _
    %p162 = scmp.le.s32.totalorder 1, %s10
    %p163 = scmp.lt.s32.totalorder %s10, 3
    %p164 = pnand %p162, %p163
    %p165 = pneg %p164
    // Predicated region
    $region33: #{tpu_custom_call.1} parent=5 // pred_check
      _
    $region34: #{tpu_custom_call.1} parent=5 // pred_check_branch
      %167 = sbr.rel (%p164) target = $region36
    $region35: #{tpu_custom_call.1} parent=5 // pred_region
      %s168 = ssub.s32 %s10, 1
      %s169 = smul.u32 32, %s15
      %p170 = scmp.lt.s32.totalorder %s169, 63
      %s171 = scalar_select %p170, %s169, 63
      %s172 = smul.addr %s171, 8
      %s173 = scalar_lea.vmem %s0, %s172
      %p174 = pneg %p36
      %p175 = pneg %p33
      %p176 = pneg %p57
      %p177 = pneg %p54
      %p178 = pneg %p78
      %p179 = pneg %p75
      %p180 = pneg %p99
      %p181 = pneg %p96
      %p182 = pneg %p125
      %p183 = pneg %p122
      %s184 = smul.u32 32, %s15
      %p185 = scmp.lt.s32.totalorder %s184, 63
      %s186 = scalar_select %p185, %s184, 63
      %s187 = smul.addr %s186, 8
      %s188 = scalar_lea.vmem %s4, %s187
      %s189 = smul.u32 32, %s15
      %p190 = scmp.lt.s32.totalorder %s189, 63
      %s191 = scalar_select %p190, %s189, 63
      %s192 = smul.addr %s191, 8
      %s193 = scalar_lea.vmem %s0, %s192
      %s194 = smul.u32 32, %s15
      %s195 = smul.u32 32, %s15
      %p196 = scmp.lt.s32.totalorder %s195, 63
      %s197 = scalar_select %p196, %s195, 63
      %s198 = smul.addr %s197, 8
      %s199 = scalar_lea.vmem %s4, %s198
      %s200 = smul.u32 32, %s15
      %v201 = vld [vmem:[%s193] sm:$0xff]
      %v202 = vld [vmem:[%s193 + $0x8] sm:$0xff]
      %v203 = vld [vmem:[%s193 + $0x10] sm:$0xff]
      %v204 = vld [vmem:[%s193 + $0x18] sm:$0xff]
      %v205 = vld [vmem:[%s193 + $0x20] sm:$0xff]
      %v206 = vld [vmem:[%s193 + $0x28] sm:$0xff]
      %v207 = vld [vmem:[%s193 + $0x30] sm:$0xff]
      %v208 = vld [vmem:[%s193 + $0x38] sm:$0xff]
      %v209 = vld [vmem:[%s193 + $0x40] sm:$0xff]
      %v210 = vld [vmem:[%s193 + $0x48] sm:$0xff]
      %v211 = vld [vmem:[%s193 + $0x50] sm:$0xff]
      %v212 = vld [vmem:[%s193 + $0x58] sm:$0xff]
      %v213 = vld [vmem:[%s193 + $0x60] sm:$0xff]
      %v214 = vld [vmem:[%s193 + $0x68] sm:$0xff]
      %v215 = vld [vmem:[%s193 + $0x70] sm:$0xff]
      %v216 = vld [vmem:[%s193 + $0x78] sm:$0xff]
      %v217 = vld [vmem:[%s193 + $0x80] sm:$0xff]
      %v218 = vld [vmem:[%s193 + $0x88] sm:$0xff]
      %v219 = vld [vmem:[%s193 + $0x90] sm:$0xff]
      %v220 = vld [vmem:[%s193 + $0x98] sm:$0xff]
      %v221 = vld [vmem:[%s193 + $0xa0] sm:$0xff]
      %v222 = vld [vmem:[%s193 + $0xa8] sm:$0xff]
      %v223 = vld [vmem:[%s193 + $0xb0] sm:$0xff]
      %v224 = vld [vmem:[%s193 + $0xb8] sm:$0xff]
      %v225 = vld [vmem:[%s193 + $0xc0] sm:$0xff]
      %v226 = vld [vmem:[%s193 + $0xc8] sm:$0xff]
      %v227 = vld [vmem:[%s193 + $0xd0] sm:$0xff]
      %v228 = vld [vmem:[%s193 + $0xd8] sm:$0xff]
      %v229 = vld [vmem:[%s193 + $0xe0] sm:$0xff]
      %v230 = vld [vmem:[%s193 + $0xe8] sm:$0xff]
      %v231 = vld [vmem:[%s193 + $0xf0] sm:$0xff]
      %v232 = vld [vmem:[%s193 + $0xf8] sm:$0xff]
      %v233 = vld [vmem:[%s1] sm:$0xff]
      %v234 = vld [vmem:[%s1 + $0x8] sm:$0xff]
      %vm235 = vcmask 130048
      %v237 = vsel %vm235, %v201, 0
      %v240 = vsel %vm235, %v202, 0
      %v243 = vsel %vm235, %v203, 0
      %v246 = vsel %vm235, %v204, 0
      %v249 = vsel %vm235, %v205, 0
      %v252 = vsel %vm235, %v206, 0
      %v255 = vsel %vm235, %v207, 0
      %v258 = vsel %vm235, %v208, 0
      %v261 = vsel %vm235, %v209, 0
      %v264 = vsel %vm235, %v210, 0
      %v267 = vsel %vm235, %v211, 0
      %v270 = vsel %vm235, %v212, 0
      %v273 = vsel %vm235, %v213, 0
      %v276 = vsel %vm235, %v214, 0
      %v279 = vsel %vm235, %v215, 0
      %v282 = vsel %vm235, %v216, 0
      %v285 = vsel %vm235, %v217, 0
      %v288 = vsel %vm235, %v218, 0
      %v291 = vsel %vm235, %v219, 0
      %v294 = vsel %vm235, %v220, 0
      %v297 = vsel %vm235, %v221, 0
      %v300 = vsel %vm235, %v222, 0
      %v303 = vsel %vm235, %v223, 0
      %v306 = vsel %vm235, %v224, 0
      %v309 = vsel %vm235, %v225, 0
      %v312 = vsel %vm235, %v226, 0
      %v315 = vsel %vm235, %v227, 0
      %v318 = vsel %vm235, %v228, 0
      %v321 = vsel %vm235, %v229, 0
      %v324 = vsel %vm235, %v230, 0
      %v327 = vsel %vm235, %v231, 0
      %v330 = vsel %vm235, %v232, 0
      %332 = vmatprep.subr.mxu0 0.0
      %333 = vmatpush1.msra.mxu0 %v233
      %334 = vmatprep.subr.mxu0 0.0
      %335 = vmatpush1.msra.mxu0 %v234
      %336 = vmatprep.subr.mxu0 0.0
      %337 = vmatpush1.msra.mxu0 0.0
      %338 = vmatprep.subr.mxu0 0.0
      %339 = vmatpush1.msra.mxu0 0.0
      %340 = vmatprep.subr.mxu0 0.0
      %341 = vmatpush1.msra.mxu0 0.0
      %342 = vmatprep.subr.mxu0 0.0
      %343 = vmatpush1.msra.mxu0 0.0
      %344 = vmatprep.subr.mxu0 0.0
      %345 = vmatpush1.msra.mxu0 0.0
      %346 = vmatprep.subr.mxu0 0.0
      %347 = vmatpush1.msra.mxu0 0.0
      %348 = vmatprep.subr.mxu0 0.0
      %349 = vmatpush1.msra.mxu0 0.0
      %350 = vmatprep.subr.mxu0 0.0
      %351 = vmatpush1.msra.mxu0 0.0
      %352 = vmatprep.subr.mxu0 0.0
      %353 = vmatpush1.msra.mxu0 0.0
      %354 = vmatprep.subr.mxu0 0.0
      %355 = vmatpush1.msra.mxu0 0.0
      %356 = vmatprep.subr.mxu0 0.0
      %357 = vmatpush1.msra.mxu0 0.0
      %358 = vmatprep.subr.mxu0 0.0
      %359 = vmatpush1.msra.mxu0 0.0
      %360 = vmatprep.subr.mxu0 0.0
      %361 = vmatpush1.msra.mxu0 0.0
      %362 = vmatprep.subr.mxu0 0.0
      %363 = vmatpush1.msra.mxu0 0.0
      %364 = vmatprep.subr.mxu0 0.0
      %365 = vmatpush1.msra.mxu0 0.0
      %366 = vmatprep.subr.mxu0 0.0
      %367 = vmatpush1.msra.mxu0 0.0
      %368 = vmatprep.subr.mxu0 0.0
      %369 = vmatpush1.msra.mxu0 0.0
      %370 = vmatprep.subr.mxu0 0.0
      %371 = vmatpush1.msra.mxu0 0.0
      %372 = vmatprep.subr.mxu0 0.0
      %373 = vmatpush1.msra.mxu0 0.0
      %374 = vmatprep.subr.mxu0 0.0
      %375 = vmatpush1.msra.mxu0 0.0
      %376 = vmatprep.subr.mxu0 0.0
      %377 = vmatpush1.msra.mxu0 0.0
      %378 = vmatprep.subr.mxu0 0.0
      %379 = vmatpush1.msra.mxu0 0.0
      %380 = vmatprep.subr.mxu0 0.0
      %381 = vmatpush1.msra.mxu0 0.0
      %382 = vmatprep.subr.mxu0 0.0
      %383 = vmatpush1.msra.mxu0 0.0
      %384 = vmatprep.subr.mxu0 0.0
      %385 = vmatpush1.msra.mxu0 0.0
      %386 = vmatprep.subr.mxu0 0.0
      %387 = vmatpush1.msra.mxu0 0.0
      %388 = vmatprep.subr.mxu0 0.0
      %389 = vmatpush1.msra.mxu0 0.0
      %390 = vmatprep.subr.mxu0 0.0
      %391 = vmatpush1.msra.mxu0 0.0
      %392 = vmatprep.subr.mxu0 0.0
      %393 = vmatpush1.msra.mxu0 0.0
      %394 = vmatprep.subr.mxu0 0.0
      %395 = vmatpush1.msra.mxu0 0.0
      %396 = vmatprep.mubr.f32.mxu0 0.0
      %397 = vmatmul.mubr.f32.gmra.mrb[0].mxu0 %v237
      %v398 = vpop.f32.mrb[0].mxu0
      %v399 = vadd.f32 0.0, %v398
      %v400 = vpop.f32.mrb[0].mxu0
      %401 = vmatprep.mubr.f32.mxu0 0.0
      %402 = vmatmul.mubr.f32.gmra.mrb[0].mxu0 %v240
      %v403 = vpop.f32.mrb[0].mxu0
      %v404 = vadd.f32 0.0, %v403
      %v405 = vpop.f32.mrb[0].mxu0
      %406 = vmatprep.mubr.f32.mxu0 0.0
      %407 = vmatmul.mubr.f32.gmra.mrb[0].mxu0 %v243
      %v408 = vpop.f32.mrb[0].mxu0
      %v409 = vadd.f32 0.0, %v408
      %v410 = vpop.f32.mrb[0].mxu0
      %411 = vmatprep.mubr.f32.mxu0 0.0
      %412 = vmatmul.mubr.f32.gmra.mrb[0].mxu0 %v246
      %v413 = vpop.f32.mrb[0].mxu0
      %v414 = vadd.f32 0.0, %v413
      %v415 = vpop.f32.mrb[0].mxu0
      %416 = vmatprep.mubr.f32.mxu0 0.0
      %417 = vmatmul.mubr.f32.gmra.mrb[0].mxu0 %v249
      %v418 = vpop.f32.mrb[0].mxu0
      %v419 = vadd.f32 0.0, %v418
      %v420 = vpop.f32.mrb[0].mxu0
      %421 = vmatprep.mubr.f32.mxu0 0.0
      %422 = vmatmul.mubr.f32.gmra.mrb[0].mxu0 %v252
      %v423 = vpop.f32.mrb[0].mxu0
      %v424 = vadd.f32 0.0, %v423
      %v425 = vpop.f32.mrb[0].mxu0
      %426 = vmatprep.mubr.f32.mxu0 0.0
      %427 = vmatmul.mubr.f32.gmra.mrb[0].mxu0 %v255
      %v428 = vpop.f32.mrb[0].mxu0
      %v429 = vadd.f32 0.0, %v428
      %v430 = vpop.f32.mrb[0].mxu0
      %431 = vmatprep.mubr.f32.mxu0 0.0
      %432 = vmatmul.mubr.f32.gmra.mrb[0].mxu0 %v258
      %v433 = vpop.f32.mrb[0].mxu0
      %v434 = vadd.f32 0.0, %v433
      %v435 = vpop.f32.mrb[0].mxu0
      %436 = vmatprep.mubr.f32.mxu0 0.0
      %437 = vmatmul.mubr.f32.gmra.mrb[0].mxu0 %v261
      %v438 = vpop.f32.mrb[0].mxu0
      %v439 = vadd.f32 0.0, %v438
      %v440 = vpop.f32.mrb[0].mxu0
      %441 = vmatprep.mubr.f32.mxu0 0.0
      %442 = vmatmul.mubr.f32.gmra.mrb[0].mxu0 %v264
      %v443 = vpop.f32.mrb[0].mxu0
      %v444 = vadd.f32 0.0, %v443
      %v445 = vpop.f32.mrb[0].mxu0
      %446 = vmatprep.mubr.f32.mxu0 0.0
      %447 = vmatmul.mubr.f32.gmra.mrb[0].mxu0 %v267
      %v448 = vpop.f32.mrb[0].mxu0
      %v449 = vadd.f32 0.0, %v448
      %v450 = vpop.f32.mrb[0].mxu0
      %451 = vmatprep.mubr.f32.mxu0 0.0
      %452 = vmatmul.mubr.f32.gmra.mrb[0].mxu0 %v270
      %v453 = vpop.f32.mrb[0].mxu0
      %v454 = vadd.f32 0.0, %v453
      %v455 = vpop.f32.mrb[0].mxu0
      %456 = vmatprep.mubr.f32.mxu0 0.0
      %457 = vmatmul.mubr.f32.gmra.mrb[0].mxu0 %v273
      %v458 = vpop.f32.mrb[0].mxu0
      %v459 = vadd.f32 0.0, %v458
      %v460 = vpop.f32.mrb[0].mxu0
      %461 = vmatprep.mubr.f32.mxu0 0.0
      %462 = vmatmul.mubr.f32.gmra.mrb[0].mxu0 %v276
      %v463 = vpop.f32.mrb[0].mxu0
      %v464 = vadd.f32 0.0, %v463
      %v465 = vpop.f32.mrb[0].mxu0
      %466 = vmatprep.mubr.f32.mxu0 0.0
      %467 = vmatmul.mubr.f32.gmra.mrb[0].mxu0 %v279
      %v468 = vpop.f32.mrb[0].mxu0
      %v469 = vadd.f32 0.0, %v468
      %v470 = vpop.f32.mrb[0].mxu0
      %471 = vmatprep.mubr.f32.mxu0 0.0
      %472 = vmatmul.mubr.f32.gmra.mrb[0].mxu0 %v282
      %v473 = vpop.f32.mrb[0].mxu0
      %v474 = vadd.f32 0.0, %v473
      %v475 = vpop.f32.mrb[0].mxu0
      %476 = vmatprep.mubr.f32.mxu0 0.0
      %477 = vmatmul.mubr.f32.gmra.mrb[0].mxu0 %v285
      %v478 = vpop.f32.mrb[0].mxu0
      %v479 = vadd.f32 0.0, %v478
      %v480 = vpop.f32.mrb[0].mxu0
      %481 = vmatprep.mubr.f32.mxu0 0.0
      %482 = vmatmul.mubr.f32.gmra.mrb[0].mxu0 %v288
      %v483 = vpop.f32.mrb[0].mxu0
      %v484 = vadd.f32 0.0, %v483
      %v485 = vpop.f32.mrb[0].mxu0
      %486 = vmatprep.mubr.f32.mxu0 0.0
      %487 = vmatmul.mubr.f32.gmra.mrb[0].mxu0 %v291
      %v488 = vpop.f32.mrb[0].mxu0
      %v489 = vadd.f32 0.0, %v488
      %v490 = vpop.f32.mrb[0].mxu0
      %491 = vmatprep.mubr.f32.mxu0 0.0
      %492 = vmatmul.mubr.f32.gmra.mrb[0].mxu0 %v294
      %v493 = vpop.f32.mrb[0].mxu0
      %v494 = vadd.f32 0.0, %v493
      %v495 = vpop.f32.mrb[0].mxu0
      %496 = vmatprep.mubr.f32.mxu0 0.0
      %497 = vmatmul.mubr.f32.gmra.mrb[0].mxu0 %v297
      %v498 = vpop.f32.mrb[0].mxu0
      %v499 = vadd.f32 0.0, %v498
      %v500 = vpop.f32.mrb[0].mxu0
      %501 = vmatprep.mubr.f32.mxu0 0.0
      %502 = vmatmul.mubr.f32.gmra.mrb[0].mxu0 %v300
      %v503 = vpop.f32.mrb[0].mxu0
      %v504 = vadd.f32 0.0, %v503
      %v505 = vpop.f32.mrb[0].mxu0
      %506 = vmatprep.mubr.f32.mxu0 0.0
      %507 = vmatmul.mubr.f32.gmra.mrb[0].mxu0 %v303
      %v508 = vpop.f32.mrb[0].mxu0
      %v509 = vadd.f32 0.0, %v508
      %v510 = vpop.f32.mrb[0].mxu0
      %511 = vmatprep.mubr.f32.mxu0 0.0
      %512 = vmatmul.mubr.f32.gmra.mrb[0].mxu0 %v306
      %v513 = vpop.f32.mrb[0].mxu0
      %v514 = vadd.f32 0.0, %v513
      %v515 = vpop.f32.mrb[0].mxu0
      %516 = vmatprep.mubr.f32.mxu0 0.0
      %517 = vmatmul.mubr.f32.gmra.mrb[0].mxu0 %v309
      %v518 = vpop.f32.mrb[0].mxu0
      %v519 = vadd.f32 0.0, %v518
      %v520 = vpop.f32.mrb[0].mxu0
      %521 = vmatprep.mubr.f32.mxu0 0.0
      %522 = vmatmul.mubr.f32.gmra.mrb[0].mxu0 %v312
      %v523 = vpop.f32.mrb[0].mxu0
      %v524 = vadd.f32 0.0, %v523
      %v525 = vpop.f32.mrb[0].mxu0
      %526 = vmatprep.mubr.f32.mxu0 0.0
      %527 = vmatmul.mubr.f32.gmra.mrb[0].mxu0 %v315
      %v528 = vpop.f32.mrb[0].mxu0
      %v529 = vadd.f32 0.0, %v528
      %v530 = vpop.f32.mrb[0].mxu0
      %531 = vmatprep.mubr.f32.mxu0 0.0
      %532 = vmatmul.mubr.f32.gmra.mrb[0].mxu0 %v318
      %v533 = vpop.f32.mrb[0].mxu0
      %v534 = vadd.f32 0.0, %v533
      %v535 = vpop.f32.mrb[0].mxu0
      %536 = vmatprep.mubr.f32.mxu0 0.0
      %537 = vmatmul.mubr.f32.gmra.mrb[0].mxu0 %v321
      %v538 = vpop.f32.mrb[0].mxu0
      %v539 = vadd.f32 0.0, %v538
      %v540 = vpop.f32.mrb[0].mxu0
      %541 = vmatprep.mubr.f32.mxu0 0.0
      %542 = vmatmul.mubr.f32.gmra.mrb[0].mxu0 %v324
      %v543 = vpop.f32.mrb[0].mxu0
      %v544 = vadd.f32 0.0, %v543
      %v545 = vpop.f32.mrb[0].mxu0
      %546 = vmatprep.mubr.f32.mxu0 0.0
      %547 = vmatmul.mubr.f32.gmra.mrb[0].mxu0 %v327
      %v548 = vpop.f32.mrb[0].mxu0
      %v549 = vadd.f32 0.0, %v548
      %v550 = vpop.f32.mrb[0].mxu0
      %551 = vmatprep.mubr.f32.mxu0 0.0
      %552 = vmatmul.mubr.f32.gmra.mrb[0].mxu0 %v330
      %v553 = vpop.f32.mrb[0].mxu0
      %v554 = vadd.f32 0.0, %v553
      %v555 = vpop.f32.mrb[0].mxu0
      %556 = vdwg.mxu0
      %v557 = vld [vmem:[%s2] sm:$0x1]
      %v559 = vlaneseq
      %v560 = vshrl.u32 %v559, 7
      %v561 = vsub.s32 0, %v560
      %v562 = vrot.slane %v557, %v561
      %v564 = vmul.f32 %v399, %v562
      %v565 = vmul.f32 %v404, %v562
      %v566 = vmul.f32 %v409, %v562
      %v567 = vmul.f32 %v414, %v562
      %v568 = vmul.f32 %v419, %v562
      %v569 = vmul.f32 %v424, %v562
      %v570 = vmul.f32 %v429, %v562
      %v571 = vmul.f32 %v434, %v562
      %v572 = vmul.f32 %v439, %v562
      %v573 = vmul.f32 %v444, %v562
      %v574 = vmul.f32 %v449, %v562
      %v575 = vmul.f32 %v454, %v562
      %v576 = vmul.f32 %v459, %v562
      %v577 = vmul.f32 %v464, %v562
      %v578 = vmul.f32 %v469, %v562
      %v579 = vmul.f32 %v474, %v562
      %v580 = vmul.f32 %v479, %v562
      %v581 = vmul.f32 %v484, %v562
      %v582 = vmul.f32 %v489, %v562
      %v583 = vmul.f32 %v494, %v562
      %v584 = vmul.f32 %v499, %v562
      %v585 = vmul.f32 %v504, %v562
      %v586 = vmul.f32 %v509, %v562
      %v587 = vmul.f32 %v514, %v562
      %v588 = vmul.f32 %v519, %v562
      %v589 = vmul.f32 %v524, %v562
      %v590 = vmul.f32 %v529, %v562
      %v591 = vmul.f32 %v534, %v562
      %v592 = vmul.f32 %v539, %v562
      %v593 = vmul.f32 %v544, %v562
      %v594 = vmul.f32 %v549, %v562
      %v595 = vmul.f32 %v554, %v562
      %v596 = vld [vmem:[%s3] sm:$0x1]
      %v598 = vlaneseq
      %v599 = vshrl.u32 %v598, 7
      %v600 = vsub.s32 0, %v599
      %v601 = vrot.slane %v596, %v600
      %v603 = vadd.f32 %v564, %v601
      %v604 = vadd.f32 %v565, %v601
      %v605 = vadd.f32 %v566, %v601
      %v606 = vadd.f32 %v567, %v601
      %v607 = vadd.f32 %v568, %v601
      %v608 = vadd.f32 %v569, %v601
      %v609 = vadd.f32 %v570, %v601
      %v610 = vadd.f32 %v571, %v601
      %v611 = vadd.f32 %v572, %v601
      %v612 = vadd.f32 %v573, %v601
      %v613 = vadd.f32 %v574, %v601
      %v614 = vadd.f32 %v575, %v601
      %v615 = vadd.f32 %v576, %v601
      %v616 = vadd.f32 %v577, %v601
      %v617 = vadd.f32 %v578, %v601
      %v618 = vadd.f32 %v579, %v601
      %v619 = vadd.f32 %v580, %v601
      %v620 = vadd.f32 %v581, %v601
      %v621 = vadd.f32 %v582, %v601
      %v622 = vadd.f32 %v583, %v601
      %v623 = vadd.f32 %v584, %v601
      %v624 = vadd.f32 %v585, %v601
      %v625 = vadd.f32 %v586, %v601
      %v626 = vadd.f32 %v587, %v601
      %v627 = vadd.f32 %v588, %v601
      %v628 = vadd.f32 %v589, %v601
      %v629 = vadd.f32 %v590, %v601
      %v630 = vadd.f32 %v591, %v601
      %v631 = vadd.f32 %v592, %v601
      %v632 = vadd.f32 %v593, %v601
      %v633 = vadd.f32 %v594, %v601
      %v634 = vadd.f32 %v595, %v601
      %v635 = vmax.f32 %v603, 0.0
      %v636 = vmax.f32 %v604, 0.0
      %v637 = vmax.f32 %v605, 0.0
      %v638 = vmax.f32 %v606, 0.0
      %v639 = vmax.f32 %v607, 0.0
      %v640 = vmax.f32 %v608, 0.0
      %v641 = vmax.f32 %v609, 0.0
      %v642 = vmax.f32 %v610, 0.0
      %v643 = vmax.f32 %v611, 0.0
      %v644 = vmax.f32 %v612, 0.0
      %v645 = vmax.f32 %v613, 0.0
      %v646 = vmax.f32 %v614, 0.0
      %v647 = vmax.f32 %v615, 0.0
      %v648 = vmax.f32 %v616, 0.0
      %v649 = vmax.f32 %v617, 0.0
      %v650 = vmax.f32 %v618, 0.0
      %v651 = vmax.f32 %v619, 0.0
      %v652 = vmax.f32 %v620, 0.0
      %v653 = vmax.f32 %v621, 0.0
      %v654 = vmax.f32 %v622, 0.0
      %v655 = vmax.f32 %v623, 0.0
      %v656 = vmax.f32 %v624, 0.0
      %v657 = vmax.f32 %v625, 0.0
      %v658 = vmax.f32 %v626, 0.0
      %v659 = vmax.f32 %v627, 0.0
      %v660 = vmax.f32 %v628, 0.0
      %v661 = vmax.f32 %v629, 0.0
      %v662 = vmax.f32 %v630, 0.0
      %v663 = vmax.f32 %v631, 0.0
      %v664 = vmax.f32 %v632, 0.0
      %v665 = vmax.f32 %v633, 0.0
      %v666 = vmax.f32 %v634, 0.0
      %vm667 = vcmask 31744
      %668 = vst.msk [vmem:[%s199] sm:$0xff] %vm667, %v635
      %669 = vst.msk [vmem:[%s199 + $0x8] sm:$0xff] %vm667, %v636
      %670 = vst.msk [vmem:[%s199 + $0x10] sm:$0xff] %vm667, %v637
      %671 = vst.msk [vmem:[%s199 + $0x18] sm:$0xff] %vm667, %v638
      %672 = vst.msk [vmem:[%s199 + $0x20] sm:$0xff] %vm667, %v639
      %673 = vst.msk [vmem:[%s199 + $0x28] sm:$0xff] %vm667, %v640
      %674 = vst.msk [vmem:[%s199 + $0x30] sm:$0xff] %vm667, %v641
      %675 = vst.msk [vmem:[%s199 + $0x38] sm:$0xff] %vm667, %v642
      %676 = vst.msk [vmem:[%s199 + $0x40] sm:$0xff] %vm667, %v643
      %677 = vst.msk [vmem:[%s199 + $0x48] sm:$0xff] %vm667, %v644
      %678 = vst.msk [vmem:[%s199 + $0x50] sm:$0xff] %vm667, %v645
      %679 = vst.msk [vmem:[%s199 + $0x58] sm:$0xff] %vm667, %v646
      %680 = vst.msk [vmem:[%s199 + $0x60] sm:$0xff] %vm667, %v647
      %681 = vst.msk [vmem:[%s199 + $0x68] sm:$0xff] %vm667, %v648
      %682 = vst.msk [vmem:[%s199 + $0x70] sm:$0xff] %vm667, %v649
      %683 = vst.msk [vmem:[%s199 + $0x78] sm:$0xff] %vm667, %v650
      %684 = vst.msk [vmem:[%s199 + $0x80] sm:$0xff] %vm667, %v651
      %685 = vst.msk [vmem:[%s199 + $0x88] sm:$0xff] %vm667, %v652
      %686 = vst.msk [vmem:[%s199 + $0x90] sm:$0xff] %vm667, %v653
      %687 = vst.msk [vmem:[%s199 + $0x98] sm:$0xff] %vm667, %v654
      %688 = vst.msk [vmem:[%s199 + $0xa0] sm:$0xff] %vm667, %v655
      %689 = vst.msk [vmem:[%s199 + $0xa8] sm:$0xff] %vm667, %v656
      %690 = vst.msk [vmem:[%s199 + $0xb0] sm:$0xff] %vm667, %v657
      %691 = vst.msk [vmem:[%s199 + $0xb8] sm:$0xff] %vm667, %v658
      %692 = vst.msk [vmem:[%s199 + $0xc0] sm:$0xff] %vm667, %v659
      %693 = vst.msk [vmem:[%s199 + $0xc8] sm:$0xff] %vm667, %v660
      %694 = vst.msk [vmem:[%s199 + $0xd0] sm:$0xff] %vm667, %v661
      %695 = vst.msk [vmem:[%s199 + $0xd8] sm:$0xff] %vm667, %v662
      %696 = vst.msk [vmem:[%s199 + $0xe0] sm:$0xff] %vm667, %v663
      %697 = vst.msk [vmem:[%s199 + $0xe8] sm:$0xff] %vm667, %v664
      %698 = vst.msk [vmem:[%s199 + $0xf0] sm:$0xff] %vm667, %v665
      %699 = vst.msk [vmem:[%s199 + $0xf8] sm:$0xff] %vm667, %v666
      %s700 = smul.u32 32, %s15
      %p701 = scmp.lt.s32.totalorder %s700, 63
      %s702 = scalar_select %p701, %s700, 63
      %s703 = smul.addr %s702, 8
      %s704 = scalar_lea.vmem %s4, %s703
      // Predicated region
      $region37: #{tpu_custom_call.1} parent=35 // pred_check
        %p705 = pneg %p122
      $region38: #{tpu_custom_call.1} parent=35 // pred_check_branch
        %707 = sbr.rel (%p705) target = $region40
      $region39: #{tpu_custom_call.1} parent=35 // pred_region
        %s708 = smul.u32 32, %s15
      $region40: #{tpu_custom_call.1} parent=35 // pred_fallthru
        _
    $region36: #{tpu_custom_call.1} parent=5 // pred_fallthru
      _
    %p709 = scmp.le.s32.totalorder 2, %s10
    // Predicated region
    $region41: #{tpu_custom_call.1} parent=5 // pred_check
      %p710 = pneg %p709
    $region42: #{tpu_custom_call.1} parent=5 // pred_check_branch
      %712 = sbr.rel (%p710) target = $region44
    $region43: #{tpu_custom_call.1} parent=5 // pred_region
      %s713 = ssub.s32 %s10, 2
      // Predicated region
      $region45: #{tpu_custom_call.1} parent=43 // pred_check
        %p714 = pneg %p128
      $region46: #{tpu_custom_call.1} parent=43 // pred_check_branch
        %716 = sbr.rel (%p714) target = $region48
      $region47: #{tpu_custom_call.1} parent=43 // pred_region
        %s717 = smul.u32 32, %s16
        %p718 = scmp.lt.s32.totalorder %s717, 63
        %s719 = scalar_select %p718, %s717, 63
        %s720 = smul.addr %s719, 8
        %s721 = scalar_lea.vmem %s4, %s720
      $region48: #{tpu_custom_call.1} parent=43 // pred_fallthru
        _
    $region44: #{tpu_custom_call.1} parent=5 // pred_fallthru
      _
  $region6: #{tpu_custom_call.1} parent=0 // loop_footer
    %s14 = sadd.s32 1, %s10
  $region7: #{tpu_custom_call.1} parent=0 // loop_footer_branch
    %9 = sbr.rel target = $region3
  $region8: #{tpu_custom_call.1} parent=0 // loop_exit
    _

</llo_original>
